<compile_context>
chip_gen: v7x
topology: tpu7x:2x2x1
jax: 0.10.0
libtpu: 0.0.40
codegen_flags: <defaults>
</compile_context>

<pallas_src>
import jax
import jax.numpy as jnp
from jax import lax
from jax.experimental import pallas as pl
from jax.experimental.pallas import tpu as pltpu


_EPS_SQ = 1e-24  # (1e-12)^2 : F.normalize clamps the *norm* at 1e-12 -> clamp sum-of-squares at eps^2.


def _head_kernel_c1(f_ref, w_ref, b_ref, o_ref):
    """num_classes == 1 specialization: fused normalize + dot, no MXU.

    f_ref: [TB, D] features (VMEM)
    w_ref: [1, D]  fc weight row (VMEM)
    b_ref: [1, 1]  fc bias scalar (SMEM)
    o_ref: [TB, 1] logits
    """
    # Single pass over the feature tile; the f32 cast is expected to fuse into the two
    # lane reductions (perf item #8; fallback would be a 128-lane-chunked fori_loop).
    f = f_ref[...].astype(jnp.float32)
    w = w_ref[...].astype(jnp.float32)                      # [1, D] broadcasts over rows
    sumsq = jnp.sum(f * f, axis=-1, keepdims=True)          # [TB, 1]
    dot = jnp.sum(f * w, axis=-1, keepdims=True)            # [TB, 1]
    inv_norm = lax.rsqrt(jnp.maximum(sumsq, _EPS_SQ))       # EUP rsqrt (free slot vs. VPU)
    o_ref[...] = (dot * inv_norm + b_ref[0, 0]).astype(o_ref.dtype)


def _head_kernel(f_ref, w_ref, b_ref, o_ref):
    """General num_classes: MXU matmul on the raw features, normalize the output (perf #1).

    f_ref: [TB, D]   features (VMEM, native dtype)
    w_ref: [Cp, D]   fc weight, nn.Linear layout, zero-padded to lane-dense Cp (VMEM)
    b_ref: [1, Cp]   fc bias, zero-padded (VMEM)
    o_ref: [TB, Cp]  logits
    """
    f = f_ref[...]
    f32 = f.astype(jnp.float32)
    sumsq = jnp.sum(f32 * f32, axis=-1, keepdims=True)      # [TB, 1] norm stats in f32
    inv_norm = lax.rsqrt(jnp.maximum(sumsq, _EPS_SQ))       # EUP rsqrt
    # MXU on the raw (native-dtype) features; contract feature dims -> no in-kernel .T.
    out = lax.dot_general(
        f, w_ref[...],
        dimension_numbers=(((1,), (1,)), ((), ())),
        preferred_element_type=jnp.float32,
    )                                                       # [TB, Cp] f32
    # Per-row scale commutes with the matmul: (f/||f||) @ W.T == (f @ W.T) * (1/||f||).
    o_ref[...] = (out * inv_norm + b_ref[...].astype(jnp.float32)).astype(o_ref.dtype)


def _round_up(x, m):
    return ((x + m - 1) // m) * m


def _pick_batch_tile(B, block_b):
    """Multiple-of-8 batch tile (or the whole batch). For B >= 16 aim for >= 2 grid steps
    so the "parallel" batch axis shards across both v7x TensorCores (perf #2)."""
    if B <= 16:
        return B                                   # single tile; block == full dim is legal
    tb = _round_up(pl.cdiv(B, 2), 8)               # ~half the batch, sublane-aligned
    return min(tb, block_b)


def openclip_linear_head(features, fc_weight, fc_bias, *, block_b=1024):
    """features: [B, D]; fc_weight: [C, D] (nn.Linear layout); fc_bias: [C].

    Returns logits of shape [B] when C == 1 (matches torch .squeeze(1)), else [B, C].

    block_b: batch-tile upper bound. With the normalized-copy removed (perf #1), a
    double-buffered TB=1024 x D=1024 f32 feature tile is ~8 MiB -> fits v5e's 16 MiB
    scoped default and v7x's 32 MiB (perf #3/#4/#5); sweep up to 2048-4096 on v6e.
    """
    B, D = features.shape
    C = fc_weight.shape[0]

    tb = _pick_batch_tile(B, block_b)
    grid = (pl.cdiv(B, tb),)
    cparams = pltpu.CompilerParams(dimension_semantics=("parallel",))

    if C == 1:
        b_smem = fc_bias.reshape(1, 1).astype(jnp.float32)
        out = pl.pallas_call(
            _head_kernel_c1,
            out_shape=jax.ShapeDtypeStruct((B, 1), jnp.float32),
            grid=grid,
            in_specs=[
                pl.BlockSpec((tb, D), lambda i: (i, 0)),
                pl.BlockSpec((1, D), lambda i: (0, 0)),
                pl.BlockSpec((1, 1), lambda i: (0, 0),
                             memory_space=pltpu.MemorySpace.SMEM),
            ],
            out_specs=pl.BlockSpec((tb, 1), lambda i: (i, 0)),
            compiler_params=cparams,
        )(features, fc_weight, b_smem)
        return out[:, 0]                                    # matches torch .squeeze(1)

    # Lane-dense output (perf #6): zero-pad classes to a multiple of 128 so the output
    # store path is unmasked vst; slice the padding back off afterwards.
    c_pad = _round_up(C, 128)
    if c_pad != C:
        fc_weight = jnp.pad(fc_weight, ((0, c_pad - C), (0, 0)))
        fc_bias = jnp.pad(fc_bias, (0, c_pad - C))
    b2d = fc_bias.reshape(1, c_pad)

    out = pl.pallas_call(
        _head_kernel,
        out_shape=jax.ShapeDtypeStruct((B, c_pad), jnp.float32),
        grid=grid,
        in_specs=[
            pl.BlockSpec((tb, D), lambda i: (i, 0)),
            # Constant-index blocks: candidates for pipeline_mode=pl.Buffered(1) when C is
            # very large (perf #7); left default-buffered here (negligible at small C).
            pl.BlockSpec((c_pad, D), lambda i: (0, 0)),
            pl.BlockSpec((1, c_pad), lambda i: (0, 0)),
        ],
        out_specs=pl.BlockSpec((tb, c_pad), lambda i: (i, 0)),
        compiler_params=cparams,
    )(features, fc_weight, b2d)
    return out[:, :C]


def _reference(features, fc_weight, fc_bias):
    f = features.astype(jnp.float32)
    n = jnp.sqrt(jnp.sum(f * f, axis=-1, keepdims=True))
    f_n = f / jnp.maximum(n, 1e-12)
    out = f_n @ fc_weight.astype(jnp.float32).T + fc_bias.astype(jnp.float32)[None, :]
    return out[:, 0] if fc_weight.shape[0] == 1 else out


if __name__ == "__main__":
    # Small synthetic shapes consistent with the module:
    #   batch B=2, num_features D=32 (stands in for ViT-L/14's 768), num_classes C=1.
    B, D, C = 2, 32, 1

    key = jax.random.PRNGKey(0)
    k_feat, k_w, k_b, k_w2, k_b2, k_feat3 = jax.random.split(key, 6)

    # Stand-in for backbone.encode_image output (pre-normalization features).
    features = jax.random.normal(k_feat, (B, D), dtype=jnp.float32)

    # fc = ChannelLinear(num_features, num_classes); weight ~ N(0, 0.02) per __init__.
    fc_weight = 0.02 * jax.random.normal(k_w, (C, D), dtype=jnp.float32)
    bound = 1.0 / (D ** 0.5)
    fc_bias = jax.random.uniform(k_b, (C,), dtype=jnp.float32, minval=-bound, maxval=bound)

    # --- primary path: num_classes == 1 (module default), fused VPU/EUP kernel ---
    out = jax.block_until_ready(openclip_linear_head(features, fc_weight, fc_bias))
    ref = _reference(features, fc_weight, fc_bias)
    assert out.shape == (B,), out.shape
    assert jnp.allclose(out, ref, atol=1e-5, rtol=1e-5), (out, ref)

    # --- sanity: num_classes > 1 path (MXU + post-matmul normalize + lane-dense padding) ---
    C2 = 4
    fc_weight2 = 0.02 * jax.random.normal(k_w2, (C2, D), dtype=jnp.float32)
    fc_bias2 = jax.random.uniform(k_b2, (C2,), dtype=jnp.float32, minval=-bound, maxval=bound)
    out2 = jax.block_until_ready(openclip_linear_head(features, fc_weight2, fc_bias2))
    ref2 = _reference(features, fc_weight2, fc_bias2)
    assert out2.shape == (B, C2), out2.shape
    assert jnp.allclose(out2, ref2, atol=1e-5, rtol=1e-5), (out2, ref2)

    # --- sanity: multi-tile grid path (>=2 grid steps -> v7x megacore sharding) ---
    B3 = 64
    features3 = jax.random.normal(k_feat3, (B3, D), dtype=jnp.float32)
    out3 = jax.block_until_ready(openclip_linear_head(features3, fc_weight, fc_bias))
    ref3 = _reference(features3, fc_weight, fc_bias)
    assert out3.shape == (B3,), out3.shape
    assert jnp.allclose(out3, ref3, atol=1e-5, rtol=1e-5), (out3, ref3)

    print("KERNEL_OK")
</pallas_src>

<mosaic_0001>
module attributes {stable_mosaic.version = 11 : i64} {
  func.func @_head_kernel_c1(%arg0: i32, %arg1: memref<2x32xf32, #tpu.memory_space<vmem>>, %arg2: memref<1x32xf32, #tpu.memory_space<vmem>>, %arg3: memref<1x1xf32, #tpu.memory_space<smem>>, %arg4: memref<2x1xf32, #tpu.memory_space<vmem>>) attributes {dimension_semantics = [#tpu.dimension_semantics<parallel>], iteration_bounds = array<i64: 1>, scalar_prefetch = 0 : i64, scratch_operands = 0 : i64, tpu.core_type = #tpu.core_type<tc>, window_params = [{transform_indices = @transform_0, window_bounds = array<i64: 2, 32>}, {pipeline_mode = #tpu.pipeline_mode<synchronous>, transform_indices = @transform_1, window_bounds = array<i64: 1, 32>}, {transform_indices = @transform_2, window_bounds = array<i64: 1, 1>}, {transform_indices = @transform_3, window_bounds = array<i64: 2, 1>}]} {
    %c0 = arith.constant 0 : index
    %c0_0 = arith.constant 0 : index
    %0 = vector.load %arg1[%c0, %c0_0] : memref<2x32xf32, #tpu.memory_space<vmem>>, vector<2x32xf32>
    %c0_1 = arith.constant 0 : index
    %c0_2 = arith.constant 0 : index
    %1 = vector.load %arg2[%c0_1, %c0_2] : memref<1x32xf32, #tpu.memory_space<vmem>>, vector<1x32xf32>
    %2 = arith.mulf %0, %0 : vector<2x32xf32>
    %cst = arith.constant dense<0.000000e+00> : vector<2xf32>
    %3 = vector.multi_reduction <add>, %2, %cst [1] : vector<2x32xf32> to vector<2xf32>
    %4 = vector.shape_cast %3 : vector<2xf32> to vector<2x1xf32>
    %5 = vector.broadcast %1 : vector<1x32xf32> to vector<2x32xf32>
    %6 = arith.mulf %0, %5 : vector<2x32xf32>
    %cst_3 = arith.constant dense<0.000000e+00> : vector<2xf32>
    %7 = vector.multi_reduction <add>, %6, %cst_3 [1] : vector<2x32xf32> to vector<2xf32>
    %8 = vector.shape_cast %7 : vector<2xf32> to vector<2x1xf32>
    %cst_4 = arith.constant 1.000000e-24 : f32
    %9 = vector.broadcast %cst_4 : f32 to vector<2x1xf32>
    %10 = arith.maximumf %4, %9 : vector<2x1xf32>
    %11 = math.rsqrt %10 : vector<2x1xf32>
    %12 = arith.mulf %8, %11 : vector<2x1xf32>
    %c0_5 = arith.constant 0 : index
    %c0_6 = arith.constant 0 : index
    %13 = memref.load %arg3[%c0_5, %c0_6] : memref<1x1xf32, #tpu.memory_space<smem>>
    %14 = vector.broadcast %13 : f32 to vector<2x1xf32>
    %15 = arith.addf %12, %14 : vector<2x1xf32>
    %c0_7 = arith.constant 0 : index
    %c0_8 = arith.constant 0 : index
    %16 = vector.load %arg4[%c0_7, %c0_8] : memref<2x1xf32, #tpu.memory_space<vmem>>, vector<2x1xf32>
    tpu.vector_store %arg4[%c0_7, %c0_8], %15 {strides = array<i32>} : memref<2x1xf32, #tpu.memory_space<vmem>>, vector<2x1xf32>,
    return
  }
  func.func @transform_0(%arg0: i32) -> (i32, i32) {
    %c0_i32 = arith.constant 0 : i32
    %c0_i32_0 = arith.constant 0 : i32
    return %arg0, %c0_i32 : i32, i32
  }
  func.func @transform_1(%arg0: i32) -> (i32, i32) {
    %c0_i32 = arith.constant 0 : i32
    %c0_i32_0 = arith.constant 0 : i32
    %c0_i32_1 = arith.constant 0 : i32
    return %c0_i32, %c0_i32_0 : i32, i32
  }
  func.func @transform_2(%arg0: i32) -> (i32, i32) {
    %c0_i32 = arith.constant 0 : i32
    %c0_i32_0 = arith.constant 0 : i32
    %c0_i32_1 = arith.constant 0 : i32
    return %c0_i32, %c0_i32_0 : i32, i32
  }
  func.func @transform_3(%arg0: i32) -> (i32, i32) {
    %c0_i32 = arith.constant 0 : i32
    %c0_i32_0 = arith.constant 0 : i32
    return %arg0, %c0_i32 : i32, i32
  }
}

</mosaic_0001>

<llo_original>
// kernel: tpu_custom_call.1
$region0: #{tpu_custom_call.1}
  #allocation0 [shape = 'u32[]', space=smem, size = 0x4, offset = 0x4, fixed_abs, tag = 'smem constant byte address 0x4 - core index']
  #allocation1 [shape = 'u32[144,128]{1,0:T(1,128)}', space=vmem, size = 0x12000, scoped, tag = 'internal scratch']
  #allocation2 [shape = 'f32[1,1]{1,0:T(1,128)S(6)}', space=smem, size = 0x200, scoped, tag = 'scoped memory for tpu_custom_call.1']
  %s0 = inlined_call_operand.vmem [shape: f32[2,32], index: 0, kind: input, shape index: {}]
  %s1 = inlined_call_operand.vmem [shape: f32[1,32], index: 1, kind: input, shape index: {}]
  %s2 = inlined_call_operand.<no memory space> [shape: f32[1,1], index: 2, kind: input, shape index: {}]
  %s3 = inlined_call_operand.vmem [shape: f32[2,1], index: 3, kind: output, shape index: {}]
  %s4 = sld [smem:[#allocation0]]
  $region22: #{tpu_custom_call.1} parent=0
    _
  %s6 = ssub.s32 1, %s4
  %s7 = scalar_select 0, %s6, %s4
  %8 = sst [smem:[#allocation2]] %s2
  // Predicated region
  $region2: #{tpu_custom_call.1} parent=0 // pred_check
    _
  $region3: #{tpu_custom_call.1} parent=0 // pred_check_branch
    %10 = sbr.rel (0) target = $region5
  $region4: #{tpu_custom_call.1} parent=0 // pred_region
    _
  $region5: #{tpu_custom_call.1} parent=0 // pred_fallthru
    _
  // Predicated region
  $region6: #{tpu_custom_call.1} parent=0 // pred_check
    _
  $region7: #{tpu_custom_call.1} parent=0 // pred_check_branch
    %12 = sbr.rel (0) target = $region9
  $region8: #{tpu_custom_call.1} parent=0 // pred_region
    _
  $region9: #{tpu_custom_call.1} parent=0 // pred_fallthru
    _
  // Predicated region
  $region10: #{tpu_custom_call.1} parent=0 // pred_check
    _
  $region11: #{tpu_custom_call.1} parent=0 // pred_check_branch
    %14 = sbr.rel (0) target = $region13
  $region12: #{tpu_custom_call.1} parent=0 // pred_region
    _
  $region13: #{tpu_custom_call.1} parent=0 // pred_fallthru
    _
  %v15 = vld [vmem:[%s0] sm:$0x3]
  %v16 = vld [vmem:[%s1] sm:$0x1]
  %v17 = vmul.f32 %v15, %v15
  %vm18 = vcmask 254976
  %v19 = vsel %vm18, %v17, 0.0
  %20 = vadd.xlane.f32.xlu0 %v19
  %v21 = vpop.xlane.xlu0 %20
  %v23 = vlaneseq
  %v24 = vshrl.u32 %v23, 7
  %v25 = vsub.s32 0, %v24
  %v26 = vrot.slane %v16, %v25
  %v28 = vmul.f32 %v15, %v26
  %v29 = vsel %vm18, %v28, 0.0
  %30 = vadd.xlane.f32.xlu0 %v29
  %v31 = vpop.xlane.xlu0 %30
  %v32 = vmax.f32 %v21, 1e-24
  %v33 = vrsqrt.pop %v32
  %v34 = vmul.f32 %v31, %v33
  %s35 = sld [smem:[#allocation2]]
  %v36 = vstv %s35
  %v37 = vadd.f32 %v34, %v36
  %vm38 = vcmask 1024
  %39 = vst.msk [vmem:[%s3] sm:$0x3] %vm38, %v37
  // Predicated region
  $region14: #{tpu_custom_call.1} parent=0 // pred_check
    _
  $region15: #{tpu_custom_call.1} parent=0 // pred_check_branch
    %41 = sbr.rel (0) target = $region17
  $region16: #{tpu_custom_call.1} parent=0 // pred_region
    _
  $region17: #{tpu_custom_call.1} parent=0 // pred_fallthru
    _
  // Predicated region
  $region18: #{tpu_custom_call.1} parent=0 // pred_check
    _
  $region19: #{tpu_custom_call.1} parent=0 // pred_check_branch
    %43 = sbr.rel (0) target = $region21
  $region20: #{tpu_custom_call.1} parent=0 // pred_region
    _
  $region21: #{tpu_custom_call.1} parent=0 // pred_fallthru
    _

</llo_original>
